<compile_context>
chip_gen: v7x
topology: tpu7x:2x2x1
jax: 0.10.0
libtpu: 0.0.40
codegen_flags: <defaults>
</compile_context>

<pallas_src>
import functools

import jax
import jax.numpy as jnp
from jax.experimental import pallas as pl
from jax.experimental.pallas import tpu as pltpu


def _round_up(x, m):
    return ((x + m - 1) // m) * m


def _binary_cls_head_kernel(x_ref, w1_ref, b1_ref, w2_ref, b2_ref, o_ref,
                            acc_ref, *, n_out, tn, mxu_bf16):
    j = pl.program_id(1)

    @pl.when(j == 0)
    def _():
        acc_ref[...] = jnp.zeros_like(acc_ref)

    # dense: (TM, n_in) @ (n_in, TN) on the MXU, f32 accumulate.
    xb = x_ref[...]
    wb = w1_ref[...]
    if mxu_bf16 and xb.dtype == jnp.float32:
        xb = xb.astype(jnp.bfloat16)      # bf16-native MXU; avoids f32 multi-pass
    if mxu_bf16 and wb.dtype == jnp.float32:
        wb = wb.astype(jnp.bfloat16)
    h = jnp.dot(xb, wb, preferred_element_type=jnp.float32)
    h = jnp.tanh(h + b1_ref[...].astype(jnp.float32))           # EUP, f32

    # out_proj (n_out -> 1): VPU multiply + lane reduce (N=1 MXU matmul wastes
    # the systolic array). w2 arrives pre-reshaped as a (1, n_out) row.
    contrib = h * w2_ref[...].astype(jnp.float32)                # (TM, TN)
    if n_out % tn != 0:
        # Ragged last n_out tile: NaN-safe select kills garbage lanes before the
        # cross-lane reduction so they can never pollute valid rows.
        col = jax.lax.broadcasted_iota(jnp.int32, contrib.shape, 1) + j * tn
        contrib = jnp.where(col < n_out, contrib, 0.0)
    acc_ref[...] += jnp.sum(contrib, axis=-1, keepdims=True)     # (TM, 1)

    @pl.when(j == pl.num_programs(1) - 1)
    def _():
        o_ref[...] = (acc_ref[...]
                      + b2_ref[0, 0].astype(jnp.float32)).astype(o_ref.dtype)


@functools.partial(jax.jit, static_argnames=("block_m", "block_n", "mxu_bf16"))
def binary_cls_head(x, w1, b1, w2, b2, *, block_m=512, block_n=512,
                    mxu_bf16=True):
    """Fused dropout(id) -> dense -> tanh -> dropout(id) -> out_proj -> squeeze(-1).

    x : (batch, n_in)
    w1: (n_in, n_out)   dense.weight^T
    b1: (1, n_out)      dense.bias
    w2: (n_out, 1)      out_proj.weight^T
    b2: (1, 1)          out_proj.bias
    returns (batch,)
    """
    batch, n_in = x.shape
    n_out = w1.shape[1]

    # ---- batch (M) tiling ---------------------------------------------------
    sub = 16 if x.dtype == jnp.bfloat16 else 8
    tm_full = _round_up(batch, sub)
    tm = min(block_m, tm_full)
    if tm_full > sub:
        # Keep grid_m >= 2 when possible so both v7x TensorCores get work
        # (measured neutral on the single-core v5e/v6e).
        tm = min(tm, _round_up(pl.cdiv(batch, 2), sub))
    tm = _round_up(tm, sub)
    grid_m = pl.cdiv(batch, tm)

    # ---- hidden (n_out) tiling ----------------------------------------------
    if n_out <= block_n:
        tn = n_out                                   # single resident w1 block
    else:
        tn = max(128, (block_n // 128) * 128)        # lane-aligned w1 column tile
    grid_n = pl.cdiv(n_out, tn)

    w2_row = w2.reshape(1, n_out)   # out_proj weight as a lane-dense row

    x_b = x.dtype.itemsize
    w_b = w1.dtype.itemsize

    # Constant-index (resident) weight blocks only need a single buffer.
    weights_const = grid_n == 1
    w_mode = pl.Buffered(1) if weights_const else None

    def _spec(shape, index_map, mode):
        if mode is None:
            return pl.BlockSpec(shape, index_map)
        return pl.BlockSpec(shape, index_map, pipeline_mode=mode)

    in_specs = [
        # x: streamed batch tile (auto double-buffered), resident across the
        # inner n_out axis.
        pl.BlockSpec((tm, n_in), lambda i, j: (i, 0)),
        # dense weight / bias and out_proj weight row.
        _spec((n_in, tn), lambda i, j: (0, j), w_mode),
        _spec((1, tn), lambda i, j: (0, j), w_mode),
        _spec((1, tn), lambda i, j: (0, j), w_mode),
        # out_proj scalar bias lives in SMEM (avoids a padded (8,128) VMEM tile).
        pl.BlockSpec((1, 1), lambda i, j: (0, 0),
                     memory_space=pltpu.MemorySpace.SMEM),
    ]

    # ---- explicit VMEM budget so large tiles keep full pipelining ------------
    w1_bufs = 1 if weights_const else 2
    vmem_est = (
        2 * tm * n_in * x_b                   # double-buffered x tile
        + w1_bufs * n_in * tn * w_b           # resident / streamed w1 tile(s)
        + 4 * 8 * _round_up(tn, 128) * w_b    # b1 + w2 rows (sublane/lane padded)
        + 2 * tm * 128 * x_b                  # output blocks (lane padded)
        + tm * 128 * 4                        # f32 accumulator scratch
    )
    vmem_limit = min(max(int(vmem_est * 1.25) + (2 << 20), 32 << 20), 64 << 20)

    cost = pl.CostEstimate(
        flops=2 * batch * n_in * n_out + 3 * batch * n_out,
        transcendentals=batch * n_out,
        bytes_accessed=(batch * n_in * x_b + n_in * n_out * w_b
                        + 2 * n_out * w_b + batch * x_b),
    )

    kernel = functools.partial(_binary_cls_head_kernel,
                               n_out=n_out, tn=tn, mxu_bf16=mxu_bf16)

    out = pl.pallas_call(
        kernel,
        out_shape=jax.ShapeDtypeStruct((batch, 1), x.dtype),
        grid=(grid_m, grid_n),
        in_specs=in_specs,
        out_specs=pl.BlockSpec((tm, 1), lambda i, j: (i, 0)),
        scratch_shapes=[pltpu.VMEM((tm, 1), jnp.float32)],
        compiler_params=pltpu.CompilerParams(
            dimension_semantics=("parallel", "arbitrary"),
            vmem_limit_bytes=vmem_limit,
        ),
        cost_estimate=cost,
    )(x, w1, b1, w2_row, b2)

    return out[:, 0]   # squeeze(-1)


def init_params(key, n_in, n_out, dtype=jnp.float32):
    """Deterministic init mimicking nn.Linear default (U[-1/sqrt(fan_in), ...])."""
    k1, k2, k3, k4 = jax.random.split(key, 4)
    lim1 = 1.0 / (n_in ** 0.5)
    lim2 = 1.0 / (n_out ** 0.5)
    w1 = jax.random.uniform(k1, (n_in, n_out), dtype, -lim1, lim1)   # dense.weight^T
    b1 = jax.random.uniform(k2, (1, n_out), dtype, -lim1, lim1)      # dense.bias
    w2 = jax.random.uniform(k3, (n_out, 1), dtype, -lim2, lim2)      # out_proj.weight^T
    b2 = jax.random.uniform(k4, (1, 1), dtype, -lim2, lim2)          # out_proj.bias
    return w1, b1, w2, b2


def _reference(x, w1, b1, w2, b2):
    hp = jax.lax.Precision.HIGHEST
    h = jnp.tanh(jnp.dot(x, w1, precision=hp) + b1)
    return (jnp.dot(h, w2, precision=hp) + b2)[:, 0]


if __name__ == "__main__":
    key = jax.random.PRNGKey(0)
    kx, kp, kx2 = jax.random.split(key, 3)

    # Small shapes consistent with the module.
    batch, n_in, n_out = 8, 32, 32
    x = jax.random.normal(kx, (batch, n_in), dtype=jnp.float32)
    w1, b1, w2, b2 = init_params(kp, n_in, n_out)
    ref = _reference(x, w1, b1, w2, b2)

    # Default (bf16 MXU operands) path: compare against the f32 reference with a
    # tolerance that accounts for bf16 operand quantization.
    y = jax.block_until_ready(binary_cls_head(x, w1, b1, w2, b2))
    assert y.shape == (batch,)
    assert jnp.allclose(y, ref, atol=5e-2, rtol=5e-2), "mismatch (bf16 MXU path)"

    # Exact f32 MXU path for a tight correctness check of the kernel structure.
    y32 = jax.block_until_ready(binary_cls_head(x, w1, b1, w2, b2, mxu_bf16=False))
    assert jnp.allclose(y32, ref, atol=1e-4, rtol=1e-4), "mismatch (f32 path)"

    # Multi-step grid with an unpadded, ragged edge batch tile (no host jnp.pad).
    batch2 = 300
    x2 = jax.random.normal(kx2, (batch2, n_in), dtype=jnp.float32)
    ref2 = _reference(x2, w1, b1, w2, b2)
    y2 = jax.block_until_ready(binary_cls_head(x2, w1, b1, w2, b2, block_m=128))
    assert y2.shape == (batch2,)
    assert jnp.allclose(y2, ref2, atol=5e-2, rtol=5e-2), "mismatch (tiled / ragged edge)"

    print("KERNEL_OK")
</pallas_src>

<mosaic_0001>
module attributes {stable_mosaic.version = 11 : i64} {
  func.func @_binary_cls_head_kernel(%arg0: i32, %arg1: i32, %arg2: memref<8x32xf32, #tpu.memory_space<vmem>>, %arg3: memref<32x32xf32, #tpu.memory_space<vmem>>, %arg4: memref<1x32xf32, #tpu.memory_space<vmem>>, %arg5: memref<1x32xf32, #tpu.memory_space<vmem>>, %arg6: memref<1x1xf32, #tpu.memory_space<smem>>, %arg7: memref<8x1xf32, #tpu.memory_space<vmem>>, %arg8: memref<8x1xf32, #tpu.memory_space<vmem>>) attributes {dimension_semantics = [#tpu.dimension_semantics<parallel>, #tpu.dimension_semantics<arbitrary>], iteration_bounds = array<i64: 1, 1>, scalar_prefetch = 0 : i64, scratch_operands = 1 : i64, tpu.core_type = #tpu.core_type<tc>, window_params = [{transform_indices = @transform_0, window_bounds = array<i64: 8, 32>}, {pipeline_mode = #tpu.pipeline_mode<synchronous>, transform_indices = @transform_1, window_bounds = array<i64: 32, 32>}, {pipeline_mode = #tpu.pipeline_mode<synchronous>, transform_indices = @transform_2, window_bounds = array<i64: 1, 32>}, {pipeline_mode = #tpu.pipeline_mode<synchronous>, transform_indices = @transform_3, window_bounds = array<i64: 1, 32>}, {transform_indices = @transform_4, window_bounds = array<i64: 1, 1>}, {transform_indices = @transform_5, window_bounds = array<i64: 8, 1>}]} {
    %c0_i32 = arith.constant 0 : i32
    %0 = arith.cmpi eq, %arg1, %c0_i32 : i32
    %1 = arith.extui %0 : i1 to i32
    %c0_i32_0 = arith.constant 0 : i32
    %2 = arith.cmpi ne, %1, %c0_i32_0 : i32
    scf.if %2 {
      %cst_15 = arith.constant 0.000000e+00 : f32
      %23 = vector.broadcast %cst_15 : f32 to vector<8x1xf32>
      %c0_16 = arith.constant 0 : index
      %c0_17 = arith.constant 0 : index
      %24 = vector.load %arg8[%c0_16, %c0_17] : memref<8x1xf32, #tpu.memory_space<vmem>>, vector<8x1xf32>
      tpu.vector_store %arg8[%c0_16, %c0_17], %23 {strides = array<i32>} : memref<8x1xf32, #tpu.memory_space<vmem>>, vector<8x1xf32>,
    } else {
    }
    %c0 = arith.constant 0 : index
    %c0_1 = arith.constant 0 : index
    %3 = vector.load %arg2[%c0, %c0_1] : memref<8x32xf32, #tpu.memory_space<vmem>>, vector<8x32xf32>
    %c0_2 = arith.constant 0 : index
    %c0_3 = arith.constant 0 : index
    %4 = vector.load %arg3[%c0_2, %c0_3] : memref<32x32xf32, #tpu.memory_space<vmem>>, vector<32x32xf32>
    %5 = arith.truncf %3 : vector<8x32xf32> to vector<8x32xbf16>
    %6 = arith.truncf %4 : vector<32x32xf32> to vector<32x32xbf16>
    %cst = arith.constant dense<0.000000e+00> : vector<8x32xf32>
    %7 = tpu.matmul %5, %6, %cst {dimension_numbers = #tpu.dot_dimension_numbers<[1], [0], [0], [1], [0, 0, 1, 1], [], []>} : vector<8x32xbf16>, vector<32x32xbf16>, vector<8x32xf32> -> vector<8x32xf32>
    %c0_4 = arith.constant 0 : index
    %c0_5 = arith.constant 0 : index
    %8 = vector.load %arg4[%c0_4, %c0_5] : memref<1x32xf32, #tpu.memory_space<vmem>>, vector<1x32xf32>
    %9 = vector.broadcast %8 : vector<1x32xf32> to vector<8x32xf32>
    %10 = arith.addf %7, %9 : vector<8x32xf32>
    %11 = math.tanh %10 : vector<8x32xf32>
    %c0_6 = arith.constant 0 : index
    %c0_7 = arith.constant 0 : index
    %12 = vector.load %arg5[%c0_6, %c0_7] : memref<1x32xf32, #tpu.memory_space<vmem>>, vector<1x32xf32>
    %13 = vector.broadcast %12 : vector<1x32xf32> to vector<8x32xf32>
    %14 = arith.mulf %11, %13 : vector<8x32xf32>
    %c0_8 = arith.constant 0 : index
    %c0_9 = arith.constant 0 : index
    %15 = vector.load %arg8[%c0_8, %c0_9] : memref<8x1xf32, #tpu.memory_space<vmem>>, vector<8x1xf32>
    %cst_10 = arith.constant dense<0.000000e+00> : vector<8xf32>
    %16 = vector.multi_reduction <add>, %14, %cst_10 [1] : vector<8x32xf32> to vector<8xf32>
    %17 = vector.shape_cast %16 : vector<8xf32> to vector<8x1xf32>
    %18 = arith.addf %15, %17 : vector<8x1xf32>
    %c0_11 = arith.constant 0 : index
    %c0_12 = arith.constant 0 : index
    %19 = vector.load %arg8[%c0_11, %c0_12] : memref<8x1xf32, #tpu.memory_space<vmem>>, vector<8x1xf32>
    tpu.vector_store %arg8[%c0_11, %c0_12], %18 {strides = array<i32>} : memref<8x1xf32, #tpu.memory_space<vmem>>, vector<8x1xf32>,
    %c0_i32_13 = arith.constant 0 : i32
    %20 = arith.cmpi eq, %arg1, %c0_i32_13 : i32
    %21 = arith.extui %20 : i1 to i32
    %c0_i32_14 = arith.constant 0 : i32
    %22 = arith.cmpi ne, %21, %c0_i32_14 : i32
    scf.if %22 {
      %c0_15 = arith.constant 0 : index
      %c0_16 = arith.constant 0 : index
      %23 = vector.load %arg8[%c0_15, %c0_16] : memref<8x1xf32, #tpu.memory_space<vmem>>, vector<8x1xf32>
      %c0_17 = arith.constant 0 : index
      %c0_18 = arith.constant 0 : index
      %24 = memref.load %arg6[%c0_17, %c0_18] : memref<1x1xf32, #tpu.memory_space<smem>>
      %25 = vector.broadcast %24 : f32 to vector<8x1xf32>
      %26 = arith.addf %23, %25 : vector<8x1xf32>
      %c0_19 = arith.constant 0 : index
      %c0_20 = arith.constant 0 : index
      %27 = vector.load %arg7[%c0_19, %c0_20] : memref<8x1xf32, #tpu.memory_space<vmem>>, vector<8x1xf32>
      tpu.vector_store %arg7[%c0_19, %c0_20], %26 {strides = array<i32>} : memref<8x1xf32, #tpu.memory_space<vmem>>, vector<8x1xf32>,
    } else {
    }
    return
  }
  func.func @transform_0(%arg0: i32, %arg1: i32) -> (i32, i32) {
    %c0_i32 = arith.constant 0 : i32
    %c0_i32_0 = arith.constant 0 : i32
    return %arg0, %c0_i32 : i32, i32
  }
  func.func @transform_1(%arg0: i32, %arg1: i32) -> (i32, i32) {
    %c0_i32 = arith.constant 0 : i32
    %c0_i32_0 = arith.constant 0 : i32
    return %c0_i32, %arg1 : i32, i32
  }
  func.func @transform_2(%arg0: i32, %arg1: i32) -> (i32, i32) {
    %c0_i32 = arith.constant 0 : i32
    %c0_i32_0 = arith.constant 0 : i32
    return %c0_i32, %arg1 : i32, i32
  }
  func.func @transform_3(%arg0: i32, %arg1: i32) -> (i32, i32) {
    %c0_i32 = arith.constant 0 : i32
    %c0_i32_0 = arith.constant 0 : i32
    return %c0_i32, %arg1 : i32, i32
  }
  func.func @transform_4(%arg0: i32, %arg1: i32) -> (i32, i32) {
    %c0_i32 = arith.constant 0 : i32
    %c0_i32_0 = arith.constant 0 : i32
    %c0_i32_1 = arith.constant 0 : i32
    return %c0_i32, %c0_i32_0 : i32, i32
  }
  func.func @transform_5(%arg0: i32, %arg1: i32) -> (i32, i32) {
    %c0_i32 = arith.constant 0 : i32
    %c0_i32_0 = arith.constant 0 : i32
    return %arg0, %c0_i32 : i32, i32
  }
}

</mosaic_0001>

<llo_original>
// kernel: binary_cls_head.1
$region0: #{binary_cls_head.1}
  #allocation0 [shape = 'u32[]', space=smem, size = 0x4, offset = 0x4, fixed_abs, tag = 'smem constant byte address 0x4 - core index']
  #allocation1 [shape = 'u32[144,128]{1,0:T(1,128)}', space=vmem, size = 0x12000, scoped, tag = 'internal scratch']
  #allocation2 [shape = 'f32[8,1]{1,0:T(8,128)}', space=vmem, size = 0x1000, scoped, tag = 'scratch operand']
  #allocation3 [shape = 'f32[1,1]{1,0:T(1,128)S(6)}', space=smem, size = 0x200, scoped, tag = 'scoped memory for binary_cls_head.1']
  %s0 = inlined_call_operand.hbm [shape: f32[8,32], index: 0, kind: input, shape index: {}]
  %s1 = inlined_call_operand.hbm [shape: f32[32,32], index: 1, kind: input, shape index: {}]
  %s2 = inlined_call_operand.vmem [shape: f32[1,32], index: 2, kind: input, shape index: {}]
  %s3 = inlined_call_operand.vmem [shape: f32[1,32], index: 3, kind: input, shape index: {}]
  %s4 = inlined_call_operand.<no memory space> [shape: f32[1,1], index: 4, kind: input, shape index: {}]
  %s5 = inlined_call_operand.vmem [shape: f32[8,1], index: 5, kind: output, shape index: {}]
  %s6 = sld [smem:[#allocation0]]
  $region46: #{binary_cls_head.1} parent=0
    _
  %s8 = ssub.s32 1, %s6
  %s9 = scalar_select 0, %s8, %s6
  %10 = sst [smem:[#allocation3]] %s4
  $region1: #{binary_cls_head.1} parent=0
    #allocation4 [shape = 'u8[4096]{0}', space=vmem, size = 0x1000, scoped, tag = 'input window, operand 0, single buffered']
    #allocation5 [shape = 's32[1]{0}', space=sflag, size = 0x4, scoped, tag = 'scoped memory for binary_cls_head.1']
    #allocation6 [shape = 'u8[16384]{0}', space=vmem, size = 0x4000, scoped, tag = 'input window, operand 1, single buffered']
    #allocation7 [shape = 's32[1]{0}', space=sflag, size = 0x4, scoped, tag = 'scoped memory for binary_cls_head.1']
    %11 = vsyncpa [#allocation5], 0
    %12 = vsyncpa [#allocation7], 0
    // Predicated region
    $region2: #{binary_cls_head.1} parent=1 // pred_check
      _
    $region3: #{binary_cls_head.1} parent=1 // pred_check_branch
      %14 = sbr.rel (0) target = $region5
    $region4: #{binary_cls_head.1} parent=1 // pred_region
      %s16 = ssub.s32 128, 128
      %17 = vsyncadd [#allocation5], %s16
      %s19 = sshll.u32 [#allocation4], 4
      %s20 = int_to_ptr.vmem [resolvable:$true] %s19
      %22 = dma.hbm_to_vmem [thread:$0]  %s0, 128, %s20, [#allocation5]
    $region5: #{binary_cls_head.1} parent=1 // pred_fallthru
      _
    // Predicated region
    $region6: #{binary_cls_head.1} parent=1 // pred_check
      _
    $region7: #{binary_cls_head.1} parent=1 // pred_check_branch
      %24 = sbr.rel (0) target = $region9
    $region8: #{binary_cls_head.1} parent=1 // pred_region
      %s26 = ssub.s32 512, 512
      %27 = vsyncadd [#allocation7], %s26
      %s28 = sshll.u32 [#allocation6], 4
      %s29 = int_to_ptr.vmem [resolvable:$true] %s28
      %34 = dma.hbm_to_vmem [thread:$0]  %s1, 512, %s29, [#allocation7], 128, 128, 8
    $region9: #{binary_cls_head.1} parent=1 // pred_fallthru
      _
    // Predicated region
    $region10: #{binary_cls_head.1} parent=1 // pred_check
      _
    $region11: #{binary_cls_head.1} parent=1 // pred_check_branch
      %36 = sbr.rel (0) target = $region13
    $region12: #{binary_cls_head.1} parent=1 // pred_region
      _
    $region13: #{binary_cls_head.1} parent=1 // pred_fallthru
      _
    // Predicated region
    $region14: #{binary_cls_head.1} parent=1 // pred_check
      _
    $region15: #{binary_cls_head.1} parent=1 // pred_check_branch
      %38 = sbr.rel (0) target = $region17
    $region16: #{binary_cls_head.1} parent=1 // pred_region
      _
    $region17: #{binary_cls_head.1} parent=1 // pred_fallthru
      _
    // Predicated region
    $region18: #{binary_cls_head.1} parent=1 // pred_check
      _
    $region19: #{binary_cls_head.1} parent=1 // pred_check_branch
      %40 = sbr.rel (0) target = $region21
    $region20: #{binary_cls_head.1} parent=1 // pred_region
      _
    $region21: #{binary_cls_head.1} parent=1 // pred_fallthru
      _
    // Predicated region
    $region22: #{binary_cls_head.1} parent=1 // pred_check
      _
    $region23: #{binary_cls_head.1} parent=1 // pred_check_branch
      %42 = sbr.rel (0) target = $region25
    $region24: #{binary_cls_head.1} parent=1 // pred_region
      %43 = dma.done [#allocation5], 128
    $region25: #{binary_cls_head.1} parent=1 // pred_fallthru
      _
    // Predicated region
    $region26: #{binary_cls_head.1} parent=1 // pred_check
      _
    $region27: #{binary_cls_head.1} parent=1 // pred_check_branch
      %45 = sbr.rel (0) target = $region29
    $region28: #{binary_cls_head.1} parent=1 // pred_region
      %46 = dma.done [#allocation7], 512
    $region29: #{binary_cls_head.1} parent=1 // pred_fallthru
      _
    %p48 = scmp.eq.s32.totalorder 0, 0
    // Predicated region
    $region30: #{binary_cls_head.1} parent=1 // pred_check
      %p49 = pneg %p48
    $region31: #{binary_cls_head.1} parent=1 // pred_check_branch
      %51 = sbr.rel (%p49) target = $region33
    $region32: #{binary_cls_head.1} parent=1 // pred_region
      %vm52 = vcmask 7168
      %53 = vst.msk [vmem:[#allocation2] sm:$0xff] %vm52, 0.0
    $region33: #{binary_cls_head.1} parent=1 // pred_fallthru
      _
    %v54 = vld [vmem:[#allocation4] sm:$0xff]
    %v55 = vld [vmem:[#allocation6] sm:$0xff]
    %v56 = vld [vmem:[#allocation6 + $0x8] sm:$0xff]
    %v57 = vld [vmem:[#allocation6 + $0x10] sm:$0xff]
    %v58 = vld [vmem:[#allocation6 + $0x18] sm:$0xff]
    %v59 = vpack.c.bf16 %v54, %v54
    %v60 = vpack.c.bf16 %v56, %v55
    %v61 = vpack.c.bf16 %v58, %v57
    %v62 = vld [vmem:[%s2] sm:$0x1]
    %v64 = vlaneseq
    %v65 = vshrl.u32 %v64, 7
    %v66 = vsub.s32 0, %v65
    %v67 = vrot.slane %v62, %v66
    %vm69 = vcmask 261120
    %v71 = vsel %vm69, %v59, 0
    %73 = vmatprep.subr.bf16.mxu0 0
    %74 = vmatpush1.bf16.msra.mxu0 %v60
    %75 = vmatprep.subr.bf16.mxu0 0
    %76 = vmatpush1.bf16.msra.mxu0 %v61
    %77 = vmatprep.subr.bf16.mxu0 0
    %78 = vmatpush1.bf16.msra.mxu0 0
    %79 = vmatprep.subr.bf16.mxu0 0
    %80 = vmatpush1.bf16.msra.mxu0 0
    %81 = vmatprep.subr.bf16.mxu0 0
    %82 = vmatpush1.bf16.msra.mxu0 0
    %83 = vmatprep.subr.bf16.mxu0 0
    %84 = vmatpush1.bf16.msra.mxu0 0
    %85 = vmatprep.subr.bf16.mxu0 0
    %86 = vmatpush1.bf16.msra.mxu0 0
    %87 = vmatprep.subr.bf16.mxu0 0
    %88 = vmatpush1.bf16.msra.mxu0 0
    %89 = vmatprep.subr.bf16.mxu0 0
    %90 = vmatpush1.bf16.msra.mxu0 0
    %91 = vmatprep.subr.bf16.mxu0 0
    %92 = vmatpush1.bf16.msra.mxu0 0
    %93 = vmatprep.subr.bf16.mxu0 0
    %94 = vmatpush1.bf16.msra.mxu0 0
    %95 = vmatprep.subr.bf16.mxu0 0
    %96 = vmatpush1.bf16.msra.mxu0 0
    %97 = vmatprep.subr.bf16.mxu0 0
    %98 = vmatpush1.bf16.msra.mxu0 0
    %99 = vmatprep.subr.bf16.mxu0 0
    %100 = vmatpush1.bf16.msra.mxu0 0
    %101 = vmatprep.subr.bf16.mxu0 0
    %102 = vmatpush1.bf16.msra.mxu0 0
    %103 = vmatprep.subr.bf16.mxu0 0
    %104 = vmatpush1.bf16.msra.mxu0 0
    %105 = vmatprep.mubr.bf16.mxu0 0
    %106 = vmatmul.mubr.bf16.gmra.mrb[0].mxu0 %v71
    %v107 = vpop.f32.mrb[0].mxu0
    %v108 = vadd.f32 %v67, %v107
    %v109 = vpop.f32.mrb[0].mxu0
    %v110 = vpop.f32.mrb[0].mxu0
    %v111 = vpop.f32.mrb[0].mxu0
    %112 = vdwg.mxu0
    %v113 = vtanh.pop %v108
    %v114 = vld [vmem:[%s3] sm:$0x1]
    %v116 = vlaneseq
    %v117 = vshrl.u32 %v116, 7
    %v118 = vsub.s32 0, %v117
    %v119 = vrot.slane %v114, %v118
    %v121 = vmul.f32 %v113, %v119
    %v122 = vld [vmem:[#allocation2] sm:$0xff]
    %v123 = vsel %vm69, %v121, 0.0
    %124 = vadd.xlane.f32.xlu0 %v123
    %v125 = vpop.xlane.xlu0 %124
    %v126 = vadd.f32 %v122, %v125
    %vm127 = vcmask 7168
    %128 = vst.msk [vmem:[#allocation2] sm:$0xff] %vm127, %v126
    // Predicated region
    $region34: #{binary_cls_head.1} parent=1 // pred_check
      %p129 = pneg %p48
    $region35: #{binary_cls_head.1} parent=1 // pred_check_branch
      %131 = sbr.rel (%p129) target = $region37
    $region36: #{binary_cls_head.1} parent=1 // pred_region
      %v132 = vld [vmem:[#allocation2] sm:$0xff]
      %s133 = sld [smem:[#allocation3]]
      %v134 = vstv %s133
      %v135 = vadd.f32 %v132, %v134
      %136 = vst.msk [vmem:[%s5] sm:$0xff] %vm127, %v135
    $region37: #{binary_cls_head.1} parent=1 // pred_fallthru
      _
    // Predicated region
    $region38: #{binary_cls_head.1} parent=1 // pred_check
      _
    $region39: #{binary_cls_head.1} parent=1 // pred_check_branch
      %138 = sbr.rel (0) target = $region41
    $region40: #{binary_cls_head.1} parent=1 // pred_region
      _
    $region41: #{binary_cls_head.1} parent=1 // pred_fallthru
      _
    // Predicated region
    $region42: #{binary_cls_head.1} parent=1 // pred_check
      _
    $region43: #{binary_cls_head.1} parent=1 // pred_check_branch
      %140 = sbr.rel (0) target = $region45
    $region44: #{binary_cls_head.1} parent=1 // pred_region
      _
    $region45: #{binary_cls_head.1} parent=1 // pred_fallthru
      _
    %141 = vsyncpa [#allocation5], 1
    %142 = vsyncpa [#allocation7], 1

</llo_original>
